<compile_context>
chip_gen: v6e
topology: v6e:2x2x1
jax: 0.10.0
libtpu: 0.0.40
codegen_flags: <defaults>
</compile_context>

<pallas_src>
import jax
import jax.numpy as jnp
from jax.experimental import pallas as pl
from jax.experimental.pallas import tpu as pltpu

LANE = 128


def _round_down8(v):
    return max(8, (int(v) // 8) * 8)


def _tpu_generation_config():
    """Returns (x_tile_budget_bytes, vmem_limit_clamp_bytes, tensorcores_per_chip)."""
    kind = ""
    try:
        kind = jax.devices()[0].device_kind.lower()
    except Exception:
        kind = ""
    vmem_phys = None
    try:
        vmem_phys = int(pltpu.get_tpu_info().vmem_capacity_bytes)
    except Exception:
        vmem_phys = None

    if "v7" in kind or "7x" in kind:
        gen = "v7x"
    elif "v6" in kind:
        gen = "v6e"
    elif "v5p" in kind:
        gen = "v5p"
    elif "v5" in kind:
        gen = "v5e"
    elif "v4" in kind:
        gen = "v4"
    else:
        gen = "unknown"

    if not vmem_phys or vmem_phys < (8 << 20):
        vmem_phys = (64 << 20) if gen in ("v7x", "unknown") else (128 << 20)

    # Dual-TensorCore parts: need >= 2 batch blocks for "parallel" to shard.
    num_cores = 2 if gen in ("v7x", "v5p", "v4") else 1

    # HBM-read-bound kernel: bigger x tiles amortise the ~0.35us grid-step cost.
    if gen == "v7x":
        x_budget = 10 << 20
    elif gen in ("v5e", "v5p", "v6e", "v4"):
        x_budget = 14 << 20
    else:
        x_budget = 8 << 20            # conservative default for unknown parts

    vmem_clamp = (48 << 20) if vmem_phys <= (64 << 20) else (96 << 20)
    vmem_clamp = min(vmem_clamp, max(int(vmem_phys * 3 // 4), 8 << 20))
    return x_budget, vmem_clamp, num_cores


def _make_kernel(seq_len, block_l, group, seq_ragged):
    groups_per_tile = block_l // group

    def kernel(x_ref, w1_ref, b1_ref, w2_ref, b2_ref, out_ref, acc_ref):
        # x_ref : (TB, TL, D)   w1_ref: (D, H)     b1_ref : (1, H)
        # w2_ref: (H, 128)      b2_ref: (1, 128)   out_ref: (TB, 128)
        # acc_ref: (TB, group, D) VMEM scratch -- running max over the sequence.
        l = pl.program_id(1)
        n_l = pl.num_programs(1)

        @pl.when(l == 0)
        def _init():
            acc_ref[...] = jnp.full_like(acc_ref, -jnp.inf)

        x = x_ref[...]
        if seq_ragged:
            # Mask the garbage rows of the ragged last seq tile with -inf so
            # they never win the max (exact; safe for a pure max reduction).
            seq_ids = (jax.lax.broadcasted_iota(jnp.int32, (1, block_l, 1), 1)
                       + l * block_l)
            x = jnp.where(seq_ids < seq_len, x, -jnp.inf)

        # Fold (TB, TL, D) -> (TB, group, D) with VPU-only elementwise maxes;
        # the single cross-sublane (XLU) reduce happens once in the finalize.
        tb, _, d = x.shape
        xg = x.reshape(tb, groups_per_tile, group, d)
        tile_max = jnp.max(xg, axis=1)
        acc_ref[...] = jnp.maximum(acc_ref[...], tile_max.astype(acc_ref.dtype))

        @pl.when(l == n_l - 1)
        def _finalize():
            pooled = jnp.max(acc_ref[...], axis=1)                # (TB, D)
            h = jnp.dot(pooled, w1_ref[...],
                        preferred_element_type=jnp.float32)
            h = jnp.maximum(h + b1_ref[...], 0.0)                 # ReLU (TB, H)
            logits = jnp.dot(h, w2_ref[...],
                             preferred_element_type=jnp.float32)
            logits = logits + b2_ref[...]                         # (TB, 128)
            # Pad lanes carry a -inf bias -> exp()==0 exactly, so the 128-wide
            # log_softmax equals the 2-class log_softmax on lanes 0..1.
            m = jnp.max(logits, axis=-1, keepdims=True)
            shifted = logits - m
            lse = jnp.log(jnp.sum(jnp.exp(shifted), axis=-1, keepdims=True))
            out_ref[...] = (shifted - lse).astype(out_ref.dtype)

    return kernel


def discriminator_forward(x, w1, b1, w2, b2, *, block_b=None, block_l=None,
                          x_tile_budget_bytes=None):
    """x: (B, L, D).  w1: (D, H)  b1: (H,)|(1,H)  w2: (H, 2)  b2: (2,)|(1,2)."""
    B, L, D = x.shape
    H = w1.shape[1]
    x_itemsize = jnp.dtype(x.dtype).itemsize
    # TODO(synk): if the upstream producer can emit bf16 activations, pass x as
    # bf16 -- the running max / MLP stay in f32 and halving the streamed HBM
    # bytes is ~2x on this HBM-read-bound kernel.

    x_budget_gen, vmem_clamp, num_cores = _tpu_generation_config()
    if x_tile_budget_bytes is None:
        x_tile_budget_bytes = x_budget_gen

    # Lane-pad the 2-class head to a dense 128-wide output slab.
    w1f = w1.astype(jnp.float32)
    b1r = b1.reshape(1, H).astype(jnp.float32)
    w2p = jnp.zeros((H, LANE), jnp.float32).at[:, :2].set(w2.astype(jnp.float32))
    b2p = jnp.full((1, LANE), -jnp.inf, dtype=jnp.float32).at[:, :2].set(
        b2.reshape(1, 2).astype(jnp.float32))

    # ---- batch tile (multiple of 8, or full extent when B <= 8) -----------
    if B <= 8:
        block_b = B
    elif block_b is None:
        block_b = min(256, _round_down8(B))
        if num_cores > 1 and B >= 16:
            # >= 2 batch blocks so the "parallel" axis shards across both TCs.
            block_b = min(block_b, _round_down8(max(8, B // num_cores)))
    else:
        block_b = B if int(block_b) >= B else _round_down8(int(block_b))

    weight_bytes = (D * H + H + H * LANE + LANE) * 4
    n_x_buf = 3              # pl.Buffered(3) when available, else double-buffer
    headroom = 2 << 20

    def _fixed_bytes(bb):
        # resident weights (x2 buffers), output block (x2), accumulator scratch
        return 2 * weight_bytes + 2 * bb * LANE * 4 + bb * 8 * D * 4 + headroom

    # Couple block_b to D: shrink (in multiples of 8) if even a minimal 8-row
    # x tile cannot fit the per-generation VMEM budget with n_x_buf buffers.
    while (block_b > 8 and
           _fixed_bytes(block_b) + n_x_buf * block_b * min(8, L) * D * x_itemsize
           > vmem_clamp):
        block_b = _round_down8(block_b // 2)

    # ---- sequence tile (multiple of 8, sized against the x budget) --------
    x_budget_eff = min(int(x_tile_budget_bytes),
                       max((vmem_clamp - _fixed_bytes(block_b)) // n_x_buf, 0))
    if L <= 8:
        block_l = L
    elif block_l is None:
        row_bytes = max(block_b * D * x_itemsize, 1)
        tl = (x_budget_eff // row_bytes // 8) * 8
        block_l = int(min((L // 8) * 8, max(8, tl)))
    else:
        block_l = L if int(block_l) >= L else max(
            8, min((int(block_l) // 8) * 8, (L // 8) * 8))

    group = 8 if block_l % 8 == 0 else 1
    seq_ragged = (L % block_l) != 0
    grid = (pl.cdiv(B, block_b), pl.cdiv(L, block_l))

    # ---- explicit VMEM budget ---------------------------------------------
    x_blk_bytes = block_b * block_l * D * x_itemsize
    vmem_limit = _fixed_bytes(block_b) + n_x_buf * x_blk_bytes
    vmem_limit = int(min(max(vmem_limit, 16 << 20), vmem_clamp))

    # Advisory cost hint so XLA schedules surrounding ops around this
    # HBM-heavy custom call sensibly.
    cost = pl.CostEstimate(
        flops=int(B * L * D + 2 * B * (D * H + H * LANE)),
        transcendentals=int(B * (LANE + 1)),
        bytes_accessed=int(B * L * D * x_itemsize + weight_bytes + B * LANE * 4),
    )

    kernel = _make_kernel(L, block_l, group, seq_ragged)

    x_index_map = lambda b, l: (b, l, 0)
    x_spec_candidates = []
    buffered = getattr(pl, "Buffered", None)
    if buffered is not None:
        try:
            x_spec_candidates.append(
                pl.BlockSpec((block_b, block_l, D), x_index_map,
                             pipeline_mode=buffered(n_x_buf)))
        except Exception:
            pass
    x_spec_candidates.append(pl.BlockSpec((block_b, block_l, D), x_index_map))

    def _call(x_spec):
        return pl.pallas_call(
            kernel,
            out_shape=jax.ShapeDtypeStruct((B, LANE), jnp.float32),
            grid_spec=pltpu.PrefetchScalarGridSpec(
                num_scalar_prefetch=0,
                grid=grid,
                in_specs=[
                    x_spec,
                    pl.BlockSpec((D, H), lambda b, l: (0, 0)),   # resident weights
                    pl.BlockSpec((1, H), lambda b, l: (0, 0)),
                    pl.BlockSpec((H, LANE), lambda b, l: (0, 0)),
                    pl.BlockSpec((1, LANE), lambda b, l: (0, 0)),
                ],
                out_specs=pl.BlockSpec((block_b, LANE), lambda b, l: (b, 0)),
                scratch_shapes=[pltpu.VMEM((block_b, group, D), jnp.float32)],
            ),
            compiler_params=pltpu.CompilerParams(
                dimension_semantics=("parallel", "arbitrary"),
                vmem_limit_bytes=vmem_limit,
            ),
            cost_estimate=cost,
        )(x, w1f, b1r, w2p, b2p)

    out_padded = None
    last_err = None
    for spec in x_spec_candidates:
        try:
            out_padded = _call(spec)
            break
        except Exception as e:       # e.g. pipeline_mode unsupported -> fallback
            last_err = e
            out_padded = None
    if out_padded is None:
        raise last_err
    return out_padded[:, :2]


def reference_forward(x, w1, b1, w2, b2):
    pooled = jnp.max(x, axis=1)
    h = jnp.maximum(pooled @ w1 + b1.reshape(1, -1), 0.0)
    logits = h @ w2 + b2.reshape(1, -1)
    return jax.nn.log_softmax(logits, axis=-1)


if __name__ == "__main__":
    key = jax.random.PRNGKey(0)
    kx, kw1, kb1, kw2, kb2, kx2, kx3 = jax.random.split(key, 7)

    # --- small shapes consistent with the module: batch=2, seq=8, input_dim=32
    B, L, D = 2, 8, 32
    H = D // 4
    x = jax.random.normal(kx, (B, L, D), dtype=jnp.float32)
    w1 = jax.random.normal(kw1, (D, H), dtype=jnp.float32) * 0.1
    b1 = jax.random.normal(kb1, (H,), dtype=jnp.float32) * 0.1
    w2 = jax.random.normal(kw2, (H, 2), dtype=jnp.float32) * 0.1
    b2 = jax.random.normal(kb2, (2,), dtype=jnp.float32) * 0.1

    out = jax.block_until_ready(discriminator_forward(x, w1, b1, w2, b2))
    ref = reference_forward(x, w1, b1, w2, b2)
    assert out.shape == (B, 2)
    assert jnp.allclose(out, ref, atol=1e-5, rtol=1e-5), "mismatch (small)"

    # --- tiled path: multi-step (batch, seq) grid with the running-max loop
    B2, L2, D2 = 8, 64, 128
    H2 = D2 // 4
    x2 = jax.random.normal(kx2, (B2, L2, D2), dtype=jnp.float32)
    w1b = jax.random.normal(kw1, (D2, H2), dtype=jnp.float32) * 0.05
    b1b = jax.random.normal(kb1, (H2,), dtype=jnp.float32) * 0.05
    w2b = jax.random.normal(kw2, (H2, 2), dtype=jnp.float32) * 0.05
    b2b = jax.random.normal(kb2, (2,), dtype=jnp.float32) * 0.05
    out2 = jax.block_until_ready(
        discriminator_forward(x2, w1b, b1b, w2b, b2b, block_b=8, block_l=16))
    ref2 = reference_forward(x2, w1b, b1b, w2b, b2b)
    assert out2.shape == (B2, 2)
    assert jnp.allclose(out2, ref2, atol=1e-5, rtol=1e-5), "mismatch (tiled)"

    # --- ragged path: B and L not divisible by the blocks (masked boundary tiles)
    B3, L3, D3 = 20, 50, 64
    H3 = D3 // 4
    x3 = jax.random.normal(kx3, (B3, L3, D3), dtype=jnp.float32)
    w1c = jax.random.normal(kw1, (D3, H3), dtype=jnp.float32) * 0.05
    b1c = jax.random.normal(kb1, (H3,), dtype=jnp.float32) * 0.05
    w2c = jax.random.normal(kw2, (H3, 2), dtype=jnp.float32) * 0.05
    b2c = jax.random.normal(kb2, (2,), dtype=jnp.float32) * 0.05
    out3 = jax.block_until_ready(
        discriminator_forward(x3, w1c, b1c, w2c, b2c, block_b=8, block_l=16))
    ref3 = reference_forward(x3, w1c, b1c, w2c, b2c)
    assert out3.shape == (B3, 2)
    assert jnp.allclose(out3, ref3, atol=1e-5, rtol=1e-5), "mismatch (ragged)"

    print("KERNEL_OK")
</pallas_src>

<mosaic_0001>
module attributes {stable_mosaic.version = 11 : i64} {
  func.func @kernel(%arg0: i32, %arg1: i32, %arg2: memref<2x8x32xf32, #tpu.memory_space<vmem>>, %arg3: memref<32x8xf32, #tpu.memory_space<vmem>>, %arg4: memref<1x8xf32, #tpu.memory_space<vmem>>, %arg5: memref<8x128xf32, #tpu.memory_space<vmem>>, %arg6: memref<1x128xf32, #tpu.memory_space<vmem>>, %arg7: memref<2x128xf32, #tpu.memory_space<vmem>>, %arg8: memref<2x8x32xf32, #tpu.memory_space<vmem>>) attributes {dimension_semantics = [#tpu.dimension_semantics<parallel>, #tpu.dimension_semantics<arbitrary>], iteration_bounds = array<i64: 1, 1>, scalar_prefetch = 0 : i64, scratch_operands = 1 : i64, tpu.core_type = #tpu.core_type<tc>, window_params = [{transform_indices = @transform_0, window_bounds = array<i64: 2, 8, 32>}, {pipeline_mode = #tpu.pipeline_mode<synchronous>, transform_indices = @transform_1, window_bounds = array<i64: 32, 8>}, {pipeline_mode = #tpu.pipeline_mode<synchronous>, transform_indices = @transform_2, window_bounds = array<i64: 1, 8>}, {pipeline_mode = #tpu.pipeline_mode<synchronous>, transform_indices = @transform_3, window_bounds = array<i64: 8, 128>}, {pipeline_mode = #tpu.pipeline_mode<synchronous>, transform_indices = @transform_4, window_bounds = array<i64: 1, 128>}, {transform_indices = @transform_5, window_bounds = array<i64: 2, 128>}]} {
    %c0_i32 = arith.constant 0 : i32
    %0 = arith.cmpi eq, %arg1, %c0_i32 : i32
    %1 = arith.extui %0 : i1 to i32
    %c0_i32_0 = arith.constant 0 : i32
    %2 = arith.cmpi ne, %1, %c0_i32_0 : i32
    scf.if %2 {
      %cst_11 = arith.constant 0xFF800000 : f32
      %12 = vector.broadcast %cst_11 : f32 to vector<2x8x32xf32>
      %c0_12 = arith.constant 0 : index
      %c0_13 = arith.constant 0 : index
      %c0_14 = arith.constant 0 : index
      %13 = vector.load %arg8[%c0_12, %c0_13, %c0_14] : memref<2x8x32xf32, #tpu.memory_space<vmem>>, vector<2x8x32xf32>
      tpu.vector_store %arg8[%c0_12, %c0_13, %c0_14], %12 {strides = array<i32>} : memref<2x8x32xf32, #tpu.memory_space<vmem>>, vector<2x8x32xf32>,
    } else {
    }
    %c0 = arith.constant 0 : index
    %c0_1 = arith.constant 0 : index
    %c0_2 = arith.constant 0 : index
    %3 = vector.load %arg2[%c0, %c0_1, %c0_2] : memref<2x8x32xf32, #tpu.memory_space<vmem>>, vector<2x8x32xf32>
    %4 = vector.shape_cast %3 : vector<2x8x32xf32> to vector<2x1x8x32xf32>
    %cst = arith.constant dense<0xFF800000> : vector<2x8x32xf32>
    %5 = vector.multi_reduction <maximumf>, %4, %cst [1] : vector<2x1x8x32xf32> to vector<2x8x32xf32>
    %c0_3 = arith.constant 0 : index
    %c0_4 = arith.constant 0 : index
    %c0_5 = arith.constant 0 : index
    %6 = vector.load %arg8[%c0_3, %c0_4, %c0_5] : memref<2x8x32xf32, #tpu.memory_space<vmem>>, vector<2x8x32xf32>
    %7 = arith.maximumf %6, %5 : vector<2x8x32xf32>
    %c0_6 = arith.constant 0 : index
    %c0_7 = arith.constant 0 : index
    %c0_8 = arith.constant 0 : index
    %8 = vector.load %arg8[%c0_6, %c0_7, %c0_8] : memref<2x8x32xf32, #tpu.memory_space<vmem>>, vector<2x8x32xf32>
    tpu.vector_store %arg8[%c0_6, %c0_7, %c0_8], %7 {strides = array<i32>} : memref<2x8x32xf32, #tpu.memory_space<vmem>>, vector<2x8x32xf32>,
    %c0_i32_9 = arith.constant 0 : i32
    %9 = arith.cmpi eq, %arg1, %c0_i32_9 : i32
    %10 = arith.extui %9 : i1 to i32
    %c0_i32_10 = arith.constant 0 : i32
    %11 = arith.cmpi ne, %10, %c0_i32_10 : i32
    scf.if %11 {
      %c0_11 = arith.constant 0 : index
      %c0_12 = arith.constant 0 : index
      %c0_13 = arith.constant 0 : index
      %12 = vector.load %arg8[%c0_11, %c0_12, %c0_13] : memref<2x8x32xf32, #tpu.memory_space<vmem>>, vector<2x8x32xf32>
      %cst_14 = arith.constant dense<0xFF800000> : vector<2x32xf32>
      %13 = vector.multi_reduction <maximumf>, %12, %cst_14 [1] : vector<2x8x32xf32> to vector<2x32xf32>
      %c0_15 = arith.constant 0 : index
      %c0_16 = arith.constant 0 : index
      %14 = vector.load %arg3[%c0_15, %c0_16] : memref<32x8xf32, #tpu.memory_space<vmem>>, vector<32x8xf32>
      %cst_17 = arith.constant dense<0.000000e+00> : vector<2x8xf32>
      %15 = tpu.matmul %13, %14, %cst_17 {dimension_numbers = #tpu.dot_dimension_numbers<[1], [0], [0], [1], [0, 0, 1, 1], [], []>} : vector<2x32xf32>, vector<32x8xf32>, vector<2x8xf32> -> vector<2x8xf32>
      %c0_18 = arith.constant 0 : index
      %c0_19 = arith.constant 0 : index
      %16 = vector.load %arg4[%c0_18, %c0_19] : memref<1x8xf32, #tpu.memory_space<vmem>>, vector<1x8xf32>
      %17 = vector.broadcast %16 : vector<1x8xf32> to vector<2x8xf32>
      %18 = arith.addf %15, %17 : vector<2x8xf32>
      %cst_20 = arith.constant 0.000000e+00 : f32
      %19 = vector.broadcast %cst_20 : f32 to vector<2x8xf32>
      %20 = arith.maximumf %18, %19 : vector<2x8xf32>
      %c0_21 = arith.constant 0 : index
      %c0_22 = arith.constant 0 : index
      %21 = vector.load %arg5[%c0_21, %c0_22] : memref<8x128xf32, #tpu.memory_space<vmem>>, vector<8x128xf32>
      %cst_23 = arith.constant dense<0.000000e+00> : vector<2x128xf32>
      %22 = tpu.matmul %20, %21, %cst_23 {dimension_numbers = #tpu.dot_dimension_numbers<[1], [0], [0], [1], [0, 0, 1, 1], [], []>} : vector<2x8xf32>, vector<8x128xf32>, vector<2x128xf32> -> vector<2x128xf32>
      %c0_24 = arith.constant 0 : index
      %c0_25 = arith.constant 0 : index
      %23 = vector.load %arg6[%c0_24, %c0_25] : memref<1x128xf32, #tpu.memory_space<vmem>>, vector<1x128xf32>
      %24 = vector.broadcast %23 : vector<1x128xf32> to vector<2x128xf32>
      %25 = arith.addf %22, %24 : vector<2x128xf32>
      %cst_26 = arith.constant dense<0xFF800000> : vector<2xf32>
      %26 = vector.multi_reduction <maximumf>, %25, %cst_26 [1] : vector<2x128xf32> to vector<2xf32>
      %27 = vector.shape_cast %26 : vector<2xf32> to vector<2x1xf32>
      %28 = vector.broadcast %27 : vector<2x1xf32> to vector<2x128xf32>
      %29 = arith.subf %25, %28 : vector<2x128xf32>
      %30 = math.exp %29 : vector<2x128xf32>
      %cst_27 = arith.constant dense<0.000000e+00> : vector<2xf32>
      %31 = vector.multi_reduction <add>, %30, %cst_27 [1] : vector<2x128xf32> to vector<2xf32>
      %32 = vector.shape_cast %31 : vector<2xf32> to vector<2x1xf32>
      %33 = math.log %32 : vector<2x1xf32>
      %34 = vector.broadcast %33 : vector<2x1xf32> to vector<2x128xf32>
      %35 = arith.subf %29, %34 : vector<2x128xf32>
      %c0_28 = arith.constant 0 : index
      %c0_29 = arith.constant 0 : index
      %36 = vector.load %arg7[%c0_28, %c0_29] : memref<2x128xf32, #tpu.memory_space<vmem>>, vector<2x128xf32>
      tpu.vector_store %arg7[%c0_28, %c0_29], %35 {strides = array<i32>} : memref<2x128xf32, #tpu.memory_space<vmem>>, vector<2x128xf32>,
    } else {
    }
    return
  }
  func.func @transform_0(%arg0: i32, %arg1: i32) -> (i32, i32, i32) {
    %c0_i32 = arith.constant 0 : i32
    %c0_i32_0 = arith.constant 0 : i32
    return %arg0, %arg1, %c0_i32 : i32, i32, i32
  }
  func.func @transform_1(%arg0: i32, %arg1: i32) -> (i32, i32) {
    %c0_i32 = arith.constant 0 : i32
    %c0_i32_0 = arith.constant 0 : i32
    %c0_i32_1 = arith.constant 0 : i32
    return %c0_i32, %c0_i32_0 : i32, i32
  }
  func.func @transform_2(%arg0: i32, %arg1: i32) -> (i32, i32) {
    %c0_i32 = arith.constant 0 : i32
    %c0_i32_0 = arith.constant 0 : i32
    %c0_i32_1 = arith.constant 0 : i32
    return %c0_i32, %c0_i32_0 : i32, i32
  }
  func.func @transform_3(%arg0: i32, %arg1: i32) -> (i32, i32) {
    %c0_i32 = arith.constant 0 : i32
    %c0_i32_0 = arith.constant 0 : i32
    %c0_i32_1 = arith.constant 0 : i32
    return %c0_i32, %c0_i32_0 : i32, i32
  }
  func.func @transform_4(%arg0: i32, %arg1: i32) -> (i32, i32) {
    %c0_i32 = arith.constant 0 : i32
    %c0_i32_0 = arith.constant 0 : i32
    %c0_i32_1 = arith.constant 0 : i32
    return %c0_i32, %c0_i32_0 : i32, i32
  }
  func.func @transform_5(%arg0: i32, %arg1: i32) -> (i32, i32) {
    %c0_i32 = arith.constant 0 : i32
    %c0_i32_0 = arith.constant 0 : i32
    return %arg0, %c0_i32 : i32, i32
  }
}

</mosaic_0001>

<llo_original>
// kernel: tpu_custom_call.1
$region0: #{tpu_custom_call.1}
  #allocation0 [shape = 'u32[]', space=smem, size = 0x4, offset = 0x4, fixed_abs, tag = 'smem constant byte address 0x4 - core index']
  #allocation1 [shape = 'u32[144,128]{1,0:T(1,128)}', space=vmem, size = 0x12000, scoped, tag = 'internal scratch']
  #allocation2 [shape = 'f32[2,8,32]{2,1,0:T(8,128)}', space=vmem, size = 0x2000, scoped, tag = 'scratch operand']
  %s0 = inlined_call_operand.vmem [shape: f32[2,8,32], index: 0, kind: input, shape index: {}]
  %s1 = inlined_call_operand.vmem [shape: f32[32,8], index: 1, kind: input, shape index: {}]
  %s2 = inlined_call_operand.vmem [shape: f32[1,8], index: 2, kind: input, shape index: {}]
  %s3 = inlined_call_operand.vmem [shape: f32[8,128], index: 3, kind: input, shape index: {}]
  %s4 = inlined_call_operand.vmem [shape: f32[1,128], index: 4, kind: input, shape index: {}]
  %s5 = inlined_call_operand.hbm [shape: f32[2,128], index: 5, kind: output, shape index: {}]
  %s6 = sld [smem:[#allocation0]]
  $region38: #{tpu_custom_call.1} parent=0
    _
  %s8 = ssub.s32 1, %s6
  %s9 = scalar_select 0, %s8, %s6
  $region1: #{tpu_custom_call.1} parent=0
    #allocation3 [shape = 'u8[1024]{0}', space=vmem, size = 0x400, scoped, tag = 'output window, operand 0, single buffered']
    #allocation4 [shape = 's32[1]{0}', space=sflag, size = 0x4, scoped, tag = 'scoped memory for tpu_custom_call.1']
    %10 = vsyncpa [#allocation4], 0
    // Predicated region
    $region2: #{tpu_custom_call.1} parent=1 // pred_check
      _
    $region3: #{tpu_custom_call.1} parent=1 // pred_check_branch
      %12 = sbr.rel (0) target = $region5
    $region4: #{tpu_custom_call.1} parent=1 // pred_region
      _
    $region5: #{tpu_custom_call.1} parent=1 // pred_fallthru
      _
    // Predicated region
    $region6: #{tpu_custom_call.1} parent=1 // pred_check
      _
    $region7: #{tpu_custom_call.1} parent=1 // pred_check_branch
      %14 = sbr.rel (0) target = $region9
    $region8: #{tpu_custom_call.1} parent=1 // pred_region
      _
    $region9: #{tpu_custom_call.1} parent=1 // pred_fallthru
      _
    // Predicated region
    $region10: #{tpu_custom_call.1} parent=1 // pred_check
      _
    $region11: #{tpu_custom_call.1} parent=1 // pred_check_branch
      %16 = sbr.rel (0) target = $region13
    $region12: #{tpu_custom_call.1} parent=1 // pred_region
      _
    $region13: #{tpu_custom_call.1} parent=1 // pred_fallthru
      _
    // Predicated region
    $region14: #{tpu_custom_call.1} parent=1 // pred_check
      _
    $region15: #{tpu_custom_call.1} parent=1 // pred_check_branch
      %18 = sbr.rel (0) target = $region17
    $region16: #{tpu_custom_call.1} parent=1 // pred_region
      _
    $region17: #{tpu_custom_call.1} parent=1 // pred_fallthru
      _
    // Predicated region
    $region18: #{tpu_custom_call.1} parent=1 // pred_check
      _
    $region19: #{tpu_custom_call.1} parent=1 // pred_check_branch
      %20 = sbr.rel (0) target = $region21
    $region20: #{tpu_custom_call.1} parent=1 // pred_region
      _
    $region21: #{tpu_custom_call.1} parent=1 // pred_fallthru
      _
    %p21 = scmp.eq.s32.totalorder 0, 0
    // Predicated region
    $region22: #{tpu_custom_call.1} parent=1 // pred_check
      %p22 = pneg %p21
    $region23: #{tpu_custom_call.1} parent=1 // pred_check_branch
      %24 = sbr.rel (%p22) target = $region25
    $region24: #{tpu_custom_call.1} parent=1 // pred_region
      %vm25 = vcmask 261120
      %26 = vst.msk [vmem:[#allocation2] sm:$0xff] %vm25, -inf
      %27 = vst.msk [vmem:[#allocation2 + $0x8] sm:$0xff] %vm25, -inf
    $region25: #{tpu_custom_call.1} parent=1 // pred_fallthru
      _
    %v28 = vld [vmem:[%s0] sm:$0xff]
    %v29 = vld [vmem:[%s0 + $0x8] sm:$0xff]
    %v30 = vld [vmem:[#allocation2] sm:$0xff]
    %v31 = vld [vmem:[#allocation2 + $0x8] sm:$0xff]
    %v32 = vmax.f32 %v30, %v28
    %v33 = vmax.f32 %v31, %v29
    %vm34 = vcmask 261120
    %35 = vst.msk [vmem:[#allocation2] sm:$0xff] %vm34, %v32
    %36 = vst.msk [vmem:[#allocation2 + $0x8] sm:$0xff] %vm34, %v33
    // Predicated region
    $region26: #{tpu_custom_call.1} parent=1 // pred_check
      %p37 = pneg %p21
    $region27: #{tpu_custom_call.1} parent=1 // pred_check_branch
      %39 = sbr.rel (%p37) target = $region29
    $region28: #{tpu_custom_call.1} parent=1 // pred_region
      %v40 = vld [vmem:[#allocation2] sm:$0xff]
      %v41 = vld [vmem:[#allocation2 + $0x8] sm:$0xff]
      %v42 = vsel %vm34, %v40, -inf
      %v43 = vrot.slane %v42, 4
      %v44 = vmax.f32 %v42, %v43
      %v45 = vrot.slane %v44, 2
      %v46 = vmax.f32 %v44, %v45
      %v47 = vrot.slane %v46, 1
      %v48 = vmax.f32 %v46, %v47
      %v49 = vsel %vm34, %v41, -inf
      %v50 = vrot.slane %v49, 4
      %v51 = vmax.f32 %v49, %v50
      %v52 = vrot.slane %v51, 2
      %v53 = vmax.f32 %v51, %v52
      %v54 = vrot.slane %v53, 1
      %v55 = vmax.f32 %v53, %v54
      %v56 = vld [vmem:[%s1] sm:$0xff]
      %v57 = vld [vmem:[%s1 + $0x8] sm:$0xff]
      %v58 = vld [vmem:[%s1 + $0x10] sm:$0xff]
      %v59 = vld [vmem:[%s1 + $0x18] sm:$0xff]
      %v60 = vld [vmem:[%s2] sm:$0x1]
      %v62 = vlaneseq
      %v63 = vshrl.u32 %v62, 7
      %v64 = vsub.s32 0, %v63
      %v65 = vrot.slane %v60, %v64
      %vm69 = vcmask 1041409
      %v70 = vsel %vm69, %v55, %v48
      %v71 = vsel %vm34, %v70, 0
      %73 = vmatprep.subr.mxu0 0.0
      %74 = vmatpush1.msra.mxu0 0.0
      %75 = vmatprep.subr.mxu0 0.0
      %76 = vmatpush1.msra.mxu0 0.0
      %77 = vmatprep.subr.mxu0 0.0
      %78 = vmatpush1.msra.mxu0 0.0
      %79 = vmatprep.subr.mxu0 0.0
      %80 = vmatpush1.msra.mxu0 0.0
      %81 = vmatprep.subr.mxu0 0.0
      %82 = vmatpush1.msra.mxu0 0.0
      %83 = vmatprep.subr.mxu0 0.0
      %84 = vmatpush1.msra.mxu0 0.0
      %85 = vmatprep.subr.mxu0 0.0
      %86 = vmatpush1.msra.mxu0 0.0
      %87 = vmatprep.subr.mxu0 0.0
      %88 = vmatpush1.msra.mxu0 0.0
      %89 = vmatprep.subr.mxu0 0.0
      %90 = vmatpush1.msra.mxu0 0.0
      %91 = vmatprep.subr.mxu0 0.0
      %92 = vmatpush1.msra.mxu0 0.0
      %93 = vmatprep.subr.mxu0 0.0
      %94 = vmatpush1.msra.mxu0 0.0
      %95 = vmatprep.subr.mxu0 0.0
      %96 = vmatpush1.msra.mxu0 0.0
      %97 = vmatprep.subr.mxu0 0.0
      %98 = vmatpush1.msra.mxu0 %v59
      %99 = vmatprep.subr.mxu0 0.0
      %100 = vmatpush1.msra.mxu0 %v58
      %101 = vmatprep.subr.mxu0 0.0
      %102 = vmatpush1.msra.mxu0 %v57
      %103 = vmatprep.subr.mxu0 0.0
      %104 = vmatpush1.msra.mxu0 %v56
      %105 = vmatprep.subr.mxu0 0.0
      %106 = vmatpush2.msra.mxu0 0.0
      %107 = vmatprep.subr.mxu0 0.0
      %108 = vmatpush2.msra.mxu0 0.0
      %109 = vmatprep.subr.mxu0 0.0
      %110 = vmatpush2.msra.mxu0 0.0
      %111 = vmatprep.subr.mxu0 0.0
      %112 = vmatpush2.msra.mxu0 0.0
      %113 = vmatprep.subr.mxu0 0.0
      %114 = vmatpush2.msra.mxu0 0.0
      %115 = vmatprep.subr.mxu0 0.0
      %116 = vmatpush2.msra.mxu0 0.0
      %117 = vmatprep.subr.mxu0 0.0
      %118 = vmatpush2.msra.mxu0 0.0
      %119 = vmatprep.subr.mxu0 0.0
      %120 = vmatpush2.msra.mxu0 0.0
      %121 = vmatprep.subr.mxu0 0.0
      %122 = vmatpush2.msra.mxu0 0.0
      %123 = vmatprep.subr.mxu0 0.0
      %124 = vmatpush2.msra.mxu0 0.0
      %125 = vmatprep.subr.mxu0 0.0
      %126 = vmatpush2.msra.mxu0 0.0
      %127 = vmatprep.subr.mxu0 0.0
      %128 = vmatpush2.msra.mxu0 0.0
      %129 = vmatprep.subr.mxu0 0.0
      %130 = vmatpush2.msra.mxu0 0.0
      %131 = vmatprep.subr.mxu0 0.0
      %132 = vmatpush2.msra.mxu0 0.0
      %133 = vmatprep.subr.mxu0 0.0
      %134 = vmatpush2.msra.mxu0 0.0
      %135 = vmatprep.subr.mxu0 0.0
      %136 = vmatpush2.msra.mxu0 0.0
      %137 = vmatprep.mubr.f32.mxu0 0.0
      %138 = vmatmul.mubr.f32.gmra.mxu0 %v71
      %v139 = vpop.f32.mrf.mxu0
      %v140 = vadd.f32 %v65, %v139
      %v141 = vpop.f32.mrf.mxu0
      %142 = vdwg.mxu0
      %v143 = vmax.f32 %v140, 0.0
      %v144 = vld [vmem:[%s3] sm:$0xff]
      %v145 = vld [vmem:[%s4] sm:$0x1]
      %v147 = vlaneseq
      %v148 = vshrl.u32 %v147, 7
      %v149 = vsub.s32 0, %v148
      %v150 = vrot.slane %v145, %v149
      %vm152 = vcmask 64512
      %v154 = vsel %vm152, %v143, 0
      %156 = vmatprep.subr.mxu0 0.0
      %157 = vmatpush1.msra.mxu0 0.0
      %158 = vmatprep.subr.mxu0 0.0
      %159 = vmatpush1.msra.mxu0 0.0
      %160 = vmatprep.subr.mxu0 0.0
      %161 = vmatpush1.msra.mxu0 0.0
      %162 = vmatprep.subr.mxu0 0.0
      %163 = vmatpush1.msra.mxu0 0.0
      %164 = vmatprep.subr.mxu0 0.0
      %165 = vmatpush1.msra.mxu0 0.0
      %166 = vmatprep.subr.mxu0 0.0
      %167 = vmatpush1.msra.mxu0 0.0
      %168 = vmatprep.subr.mxu0 0.0
      %169 = vmatpush1.msra.mxu0 0.0
      %170 = vmatprep.subr.mxu0 0.0
      %171 = vmatpush1.msra.mxu0 0.0
      %172 = vmatprep.subr.mxu0 0.0
      %173 = vmatpush1.msra.mxu0 0.0
      %174 = vmatprep.subr.mxu0 0.0
      %175 = vmatpush1.msra.mxu0 0.0
      %176 = vmatprep.subr.mxu0 0.0
      %177 = vmatpush1.msra.mxu0 0.0
      %178 = vmatprep.subr.mxu0 0.0
      %179 = vmatpush1.msra.mxu0 0.0
      %180 = vmatprep.subr.mxu0 0.0
      %181 = vmatpush1.msra.mxu0 0.0
      %182 = vmatprep.subr.mxu0 0.0
      %183 = vmatpush1.msra.mxu0 0.0
      %184 = vmatprep.subr.mxu0 0.0
      %185 = vmatpush1.msra.mxu0 0.0
      %186 = vmatprep.subr.mxu0 0.0
      %187 = vmatpush1.msra.mxu0 %v144
      %188 = vmatprep.subr.mxu0 0.0
      %189 = vmatpush2.msra.mxu0 0.0
      %190 = vmatprep.subr.mxu0 0.0
      %191 = vmatpush2.msra.mxu0 0.0
      %192 = vmatprep.subr.mxu0 0.0
      %193 = vmatpush2.msra.mxu0 0.0
      %194 = vmatprep.subr.mxu0 0.0
      %195 = vmatpush2.msra.mxu0 0.0
      %196 = vmatprep.subr.mxu0 0.0
      %197 = vmatpush2.msra.mxu0 0.0
      %198 = vmatprep.subr.mxu0 0.0
      %199 = vmatpush2.msra.mxu0 0.0
      %200 = vmatprep.subr.mxu0 0.0
      %201 = vmatpush2.msra.mxu0 0.0
      %202 = vmatprep.subr.mxu0 0.0
      %203 = vmatpush2.msra.mxu0 0.0
      %204 = vmatprep.subr.mxu0 0.0
      %205 = vmatpush2.msra.mxu0 0.0
      %206 = vmatprep.subr.mxu0 0.0
      %207 = vmatpush2.msra.mxu0 0.0
      %208 = vmatprep.subr.mxu0 0.0
      %209 = vmatpush2.msra.mxu0 0.0
      %210 = vmatprep.subr.mxu0 0.0
      %211 = vmatpush2.msra.mxu0 0.0
      %212 = vmatprep.subr.mxu0 0.0
      %213 = vmatpush2.msra.mxu0 0.0
      %214 = vmatprep.subr.mxu0 0.0
      %215 = vmatpush2.msra.mxu0 0.0
      %216 = vmatprep.subr.mxu0 0.0
      %217 = vmatpush2.msra.mxu0 0.0
      %218 = vmatprep.subr.mxu0 0.0
      %219 = vmatpush2.msra.mxu0 0.0
      %220 = vmatprep.mubr.f32.mxu0 0.0
      %221 = vmatmul.mubr.f32.gmra.mxu0 %v154
      %v222 = vpop.f32.mrf.mxu0
      %v223 = vadd.f32 %v150, %v222
      %v224 = vpop.f32.mrf.mxu0
      %225 = vdwg.mxu0
      %vm226 = vcmask 1041408
      %v227 = vsel %vm226, %v223, -inf
      %228 = vmax.xlane.f32.xlu0 %v227
      %v229 = vpop.xlane.xlu0 %228
      %v230 = vsub.f32 %v223, %v229
      %v231 = vmul.f32 %v230, 1.442695
      %v232 = vpow.pop %v231
      %v233 = vsel %vm226, %v232, 0.0
      %234 = vadd.xlane.f32.xlu0 %v233
      %v235 = vpop.xlane.xlu0 %234
      %v236 = vlog2.pop %v235
      %v237 = vmul.f32 %v236, 0.6931472
      %v238 = vsub.f32 %v230, %v237
      %239 = vst [vmem:[#allocation3] sm:$0x3] %v238
    $region29: #{tpu_custom_call.1} parent=1 // pred_fallthru
      _
    // Predicated region
    $region30: #{tpu_custom_call.1} parent=1 // pred_check
      _
    $region31: #{tpu_custom_call.1} parent=1 // pred_check_branch
      %241 = sbr.rel (0) target = $region33
    $region32: #{tpu_custom_call.1} parent=1 // pred_region
      %s243 = ssub.s32 32, 32
      %244 = vsyncadd [#allocation4], %s243
      %s246 = sshll.u32 [#allocation3], 4
      %s247 = int_to_ptr.vmem [resolvable:$true] %s246
      %249 = dma.vmem_to_hbm [thread:$0]  %s247, 32, %s5, [#allocation4]
    $region33: #{tpu_custom_call.1} parent=1 // pred_fallthru
      _
    // Predicated region
    $region34: #{tpu_custom_call.1} parent=1 // pred_check
      _
    $region35: #{tpu_custom_call.1} parent=1 // pred_check_branch
      %251 = sbr.rel (0) target = $region37
    $region36: #{tpu_custom_call.1} parent=1 // pred_region
      %252 = dma.done [#allocation4], 32
    $region37: #{tpu_custom_call.1} parent=1 // pred_fallthru
      _
    %253 = vsyncpa [#allocation4], 1

</llo_original>
